<compile_context>
chip_gen: v5e
topology: v5e:2x2
jax: 0.10.0
libtpu: 0.0.40
codegen_flags: <defaults>
</compile_context>

<pallas_src>
import jax
import jax.numpy as jnp
from jax.experimental import pallas as pl
from jax.experimental.pallas import tpu as pltpu


def _extractor_kernel(len_ref, x_ref, w1_ref, b1_ref, w2_ref, b2_ref, o_ref):
    b = pl.program_id(0)
    t = pl.program_id(1)
    seq_tile = x_ref.shape[0]

    # Valid-position mask from scalar-prefetched lengths (SMEM) + iota — no
    # separate mask input stream needed.
    length = len_ref[b]
    pos = t * seq_tile + jax.lax.broadcasted_iota(jnp.int32, (seq_tile, 1), 0)
    valid = pos < length

    # Encoder: h = tanh(x @ W1 + b1), zeroed at padded positions.
    # bf16 operands on the MXU, f32 accumulation; mask fused into the bf16
    # cast so padding costs a single select pass.
    h = jnp.tanh(
        jnp.dot(x_ref[...], w1_ref[...], preferred_element_type=jnp.float32)
        + b1_ref[...]
    )
    h_bf = jnp.where(valid, h, 0.0).astype(jnp.bfloat16)

    # Head: logits = h @ W2 + b2 (W2/b2 zero-padded to a lane-dense width).
    o_ref[...] = (
        jnp.dot(h_bf, w2_ref[...], preferred_element_type=jnp.float32)
        + b2_ref[...]
    ).astype(o_ref.dtype)


def extractor_forward(inputs, lengths, masks, params, *, seq_tile=512):
    """inputs: [B,S,E] f32, lengths: [B] int, masks: [B,S] prefix masks."""
    # `masks` encodes the same information as `lengths` (prefix padding); the
    # kernel rebuilds it from lengths in SMEM, so masks is unused here.
    del masks
    w1, b1, w2, b2 = params
    B, S, E = inputs.shape
    H = w1.shape[1]
    C = w2.shape[1]

    # Lane-dense output: pad the class dim to a multiple of 128 so each store
    # writes full 128-lane vregs (unmasked vst), sliced back afterwards.
    C_pad = ((C + 127) // 128) * 128
    w2p = jnp.zeros((H, C_pad), w2.dtype).at[:, :C].set(w2)
    b2p = jnp.zeros((C_pad,), b2.dtype).at[:C].set(b2)

    # Sequence tiling: big tiles for real shapes, full-S tile for small S.
    if S <= seq_tile:
        seq_tile = S
        S_pad = S
        x = inputs
    else:
        n_tiles = pl.cdiv(S, seq_tile)
        S_pad = int(n_tiles) * seq_tile
        x = inputs
        if S_pad != S:
            x = jnp.pad(inputs, ((0, 0), (0, S_pad - S), (0, 0)))

    # bf16 MXU operands (accumulation stays f32 inside the kernel).
    x_bf = x.astype(jnp.bfloat16)
    w1_bf = w1.astype(jnp.bfloat16)
    w2_bf = w2p.astype(jnp.bfloat16)
    b1_2d = b1.reshape(1, H).astype(jnp.float32)
    b2_2d = b2p.reshape(1, C_pad).astype(jnp.float32)
    lens = lengths.astype(jnp.int32)

    grid = (B, S_pad // seq_tile)

    out = pl.pallas_call(
        _extractor_kernel,
        out_shape=jax.ShapeDtypeStruct((B, S_pad, C_pad), jnp.float32),
        grid_spec=pltpu.PrefetchScalarGridSpec(
            num_scalar_prefetch=1,            # lengths -> SMEM
            grid=grid,
            in_specs=[
                # Streaming activations: one (seq_tile, E) slab per step.
                pl.BlockSpec((None, seq_tile, E), lambda b, t, _: (b, t, 0)),
                # Grid-invariant weights/biases: resident, single-buffered.
                pl.BlockSpec((E, H), lambda b, t, _: (0, 0),
                             pipeline_mode=pl.Buffered(1)),
                pl.BlockSpec((1, H), lambda b, t, _: (0, 0),
                             pipeline_mode=pl.Buffered(1)),
                pl.BlockSpec((H, C_pad), lambda b, t, _: (0, 0),
                             pipeline_mode=pl.Buffered(1)),
                pl.BlockSpec((1, C_pad), lambda b, t, _: (0, 0),
                             pipeline_mode=pl.Buffered(1)),
            ],
            out_specs=pl.BlockSpec((None, seq_tile, C_pad),
                                   lambda b, t, _: (b, t, 0)),
        ),
        compiler_params=pltpu.CompilerParams(
            dimension_semantics=("parallel", "parallel"),
            vmem_limit_bytes=48 * 1024 * 1024,  # > 32 MiB default, < v7x 64 MiB
        ),
    )(lens, x_bf, w1_bf, b1_2d, w2_bf, b2_2d)

    return out[:, :S, :C]


def init_params(key, embed_dim, hidden_dim, out_dim):
    k1, k2, k3, k4 = jax.random.split(key, 4)
    w1 = jax.random.normal(k1, (embed_dim, hidden_dim), jnp.float32) * 0.05
    b1 = jax.random.normal(k2, (hidden_dim,), jnp.float32) * 0.01
    w2 = jax.random.normal(k3, (hidden_dim, out_dim), jnp.float32) * 0.05
    b2 = jax.random.normal(k4, (out_dim,), jnp.float32) * 0.01
    return (w1, b1, w2, b2)


def _reference(inputs, masks, params):
    w1, b1, w2, b2 = params
    h = jnp.tanh(inputs @ w1 + b1) * masks[..., None]
    return h @ w2 + b2


if __name__ == "__main__":
    B, S, E, H, C = 2, 8, 32, 32, 2

    key = jax.random.PRNGKey(0)
    k_in, k_par = jax.random.split(key)

    inputs = jax.random.normal(k_in, (B, S, E), jnp.float32)
    lengths = jnp.array([8, 5], dtype=jnp.int32)
    pos = jnp.arange(S)[None, :]
    masks = (pos < lengths[:, None]).astype(jnp.float32)  # [B, S]

    params = init_params(k_par, E, H, C)

    out = extractor_forward(inputs, lengths, masks, params)
    out = jax.block_until_ready(out)

    ref = _reference(inputs, masks, params)
    assert out.shape == (B, S, C)
    # bf16 MXU operands (f32 accumulation) -> relaxed tolerance vs f32 ref.
    assert jnp.allclose(out, ref, atol=2e-2, rtol=2e-2), "mismatch vs reference"

    print("KERNEL_OK")
</pallas_src>

<mosaic_0001>
module attributes {stable_mosaic.version = 11 : i64} {
  func.func @_extractor_kernel(%arg0: i32, %arg1: i32, %arg2: memref<2xi32, #tpu.memory_space<smem>>, %arg3: memref<1x8x32xbf16, #tpu.memory_space<vmem>>, %arg4: memref<32x32xbf16, #tpu.memory_space<vmem>>, %arg5: memref<1x32xf32, #tpu.memory_space<vmem>>, %arg6: memref<32x128xbf16, #tpu.memory_space<vmem>>, %arg7: memref<1x128xf32, #tpu.memory_space<vmem>>, %arg8: memref<1x8x128xf32, #tpu.memory_space<vmem>>) attributes {dimension_semantics = [#tpu.dimension_semantics<parallel>, #tpu.dimension_semantics<parallel>], iteration_bounds = array<i64: 2, 1>, scalar_prefetch = 1 : i64, scratch_operands = 0 : i64, tpu.core_type = #tpu.core_type<tc>, window_params = [{transform_indices = @transform_0, window_bounds = array<i64: 1, 8, 32>}, {pipeline_mode = #tpu.pipeline_mode<synchronous>, transform_indices = @transform_1, window_bounds = array<i64: 32, 32>}, {pipeline_mode = #tpu.pipeline_mode<synchronous>, transform_indices = @transform_2, window_bounds = array<i64: 1, 32>}, {pipeline_mode = #tpu.pipeline_mode<synchronous>, transform_indices = @transform_3, window_bounds = array<i64: 32, 128>}, {pipeline_mode = #tpu.pipeline_mode<synchronous>, transform_indices = @transform_4, window_bounds = array<i64: 1, 128>}, {transform_indices = @transform_5, window_bounds = array<i64: 1, 8, 128>}]} {
    %0 = arith.index_cast %arg0 : i32 to index
    %1 = memref.load %arg2[%0] : memref<2xi32, #tpu.memory_space<smem>>
    %c8_i32 = arith.constant 8 : i32
    %2 = arith.muli %arg1, %c8_i32 : i32
    %3 = tpu.iota {dimensions = array<i32: 0>} : vector<8x1xi32>
    %4 = vector.broadcast %2 : i32 to vector<8x1xi32>
    %5 = arith.addi %4, %3 : vector<8x1xi32>
    %6 = vector.broadcast %1 : i32 to vector<8x1xi32>
    %7 = arith.cmpi slt, %5, %6 : vector<8x1xi32>
    %c0 = arith.constant 0 : index
    %c0_0 = arith.constant 0 : index
    %c0_1 = arith.constant 0 : index
    %8 = vector.load %arg3[%c0, %c0_0, %c0_1] : memref<1x8x32xbf16, #tpu.memory_space<vmem>>, vector<1x8x32xbf16>
    %9 = vector.shape_cast %8 : vector<1x8x32xbf16> to vector<8x32xbf16>
    %c0_2 = arith.constant 0 : index
    %c0_3 = arith.constant 0 : index
    %10 = vector.load %arg4[%c0_2, %c0_3] : memref<32x32xbf16, #tpu.memory_space<vmem>>, vector<32x32xbf16>
    %cst = arith.constant dense<0.000000e+00> : vector<8x32xf32>
    %11 = tpu.matmul %9, %10, %cst {dimension_numbers = #tpu.dot_dimension_numbers<[1], [0], [0], [1], [0, 0, 1, 1], [], []>} : vector<8x32xbf16>, vector<32x32xbf16>, vector<8x32xf32> -> vector<8x32xf32>
    %c0_4 = arith.constant 0 : index
    %c0_5 = arith.constant 0 : index
    %12 = vector.load %arg5[%c0_4, %c0_5] : memref<1x32xf32, #tpu.memory_space<vmem>>, vector<1x32xf32>
    %13 = vector.broadcast %12 : vector<1x32xf32> to vector<8x32xf32>
    %14 = arith.addf %11, %13 : vector<8x32xf32>
    %15 = math.tanh %14 : vector<8x32xf32>
    %cst_6 = arith.constant 0.000000e+00 : f32
    %16 = vector.shape_cast %7 : vector<8x1xi1> to vector<8x1xi1>
    %17 = vector.broadcast %16 : vector<8x1xi1> to vector<8x32xi1>
    %18 = vector.broadcast %cst_6 : f32 to vector<8x32xf32>
    %19 = arith.select %17, %15, %18 : vector<8x32xi1>, vector<8x32xf32>
    %20 = arith.truncf %19 : vector<8x32xf32> to vector<8x32xbf16>
    %c0_7 = arith.constant 0 : index
    %c0_8 = arith.constant 0 : index
    %21 = vector.load %arg6[%c0_7, %c0_8] : memref<32x128xbf16, #tpu.memory_space<vmem>>, vector<32x128xbf16>
    %cst_9 = arith.constant dense<0.000000e+00> : vector<8x128xf32>
    %22 = tpu.matmul %20, %21, %cst_9 {dimension_numbers = #tpu.dot_dimension_numbers<[1], [0], [0], [1], [0, 0, 1, 1], [], []>} : vector<8x32xbf16>, vector<32x128xbf16>, vector<8x128xf32> -> vector<8x128xf32>
    %c0_10 = arith.constant 0 : index
    %c0_11 = arith.constant 0 : index
    %23 = vector.load %arg7[%c0_10, %c0_11] : memref<1x128xf32, #tpu.memory_space<vmem>>, vector<1x128xf32>
    %24 = vector.broadcast %23 : vector<1x128xf32> to vector<8x128xf32>
    %25 = arith.addf %22, %24 : vector<8x128xf32>
    %c0_12 = arith.constant 0 : index
    %c0_13 = arith.constant 0 : index
    %c0_14 = arith.constant 0 : index
    %26 = vector.load %arg8[%c0_12, %c0_13, %c0_14] : memref<1x8x128xf32, #tpu.memory_space<vmem>>, vector<1x8x128xf32>
    %27 = vector.shape_cast %26 : vector<1x8x128xf32> to vector<8x128xf32>
    %28 = vector.shape_cast %25 : vector<8x128xf32> to vector<1x8x128xf32>
    tpu.vector_store %arg8[%c0_12, %c0_13, %c0_14], %28 {strides = array<i32>} : memref<1x8x128xf32, #tpu.memory_space<vmem>>, vector<1x8x128xf32>,
    return
  }
  func.func @transform_0(%arg0: i32, %arg1: i32, %arg2: memref<2xi32, #tpu.memory_space<smem>>) -> (i32, i32, i32) {
    %c0_i32 = arith.constant 0 : i32
    %c0_i32_0 = arith.constant 0 : i32
    return %arg0, %arg1, %c0_i32 : i32, i32, i32
  }
  func.func @transform_1(%arg0: i32, %arg1: i32, %arg2: memref<2xi32, #tpu.memory_space<smem>>) -> (i32, i32) {
    %c0_i32 = arith.constant 0 : i32
    %c0_i32_0 = arith.constant 0 : i32
    %c0_i32_1 = arith.constant 0 : i32
    return %c0_i32, %c0_i32_0 : i32, i32
  }
  func.func @transform_2(%arg0: i32, %arg1: i32, %arg2: memref<2xi32, #tpu.memory_space<smem>>) -> (i32, i32) {
    %c0_i32 = arith.constant 0 : i32
    %c0_i32_0 = arith.constant 0 : i32
    %c0_i32_1 = arith.constant 0 : i32
    return %c0_i32, %c0_i32_0 : i32, i32
  }
  func.func @transform_3(%arg0: i32, %arg1: i32, %arg2: memref<2xi32, #tpu.memory_space<smem>>) -> (i32, i32) {
    %c0_i32 = arith.constant 0 : i32
    %c0_i32_0 = arith.constant 0 : i32
    %c0_i32_1 = arith.constant 0 : i32
    return %c0_i32, %c0_i32_0 : i32, i32
  }
  func.func @transform_4(%arg0: i32, %arg1: i32, %arg2: memref<2xi32, #tpu.memory_space<smem>>) -> (i32, i32) {
    %c0_i32 = arith.constant 0 : i32
    %c0_i32_0 = arith.constant 0 : i32
    %c0_i32_1 = arith.constant 0 : i32
    return %c0_i32, %c0_i32_0 : i32, i32
  }
  func.func @transform_5(%arg0: i32, %arg1: i32, %arg2: memref<2xi32, #tpu.memory_space<smem>>) -> (i32, i32, i32) {
    %c0_i32 = arith.constant 0 : i32
    %c0_i32_0 = arith.constant 0 : i32
    return %arg0, %arg1, %c0_i32 : i32, i32, i32
  }
}

</mosaic_0001>

<llo_original>
// kernel: tpu_custom_call.1
$region0: #{tpu_custom_call.1}
  #allocation0 [shape = 'u32[]', space=smem, size = 0x4, offset = 0x4, fixed_abs, tag = 'smem constant byte address 0x4 - core index']
  #allocation1 [shape = 'u32[72,128]{1,0:T(1,128)}', space=vmem, size = 0x9000, scoped, tag = 'internal scratch']
  #allocation2 [shape = 's32[1]{0}', space=sflag, size = 0x4, scoped, tag = 'scoped memory for tpu_custom_call.1']
  #allocation3 [shape = 'u8[512]{0}', space=smem, size = 0x200, scoped, tag = 'prefetched SMEM operand 0']
  %s0 = inlined_call_operand.hbm [shape: s32[2], index: 0, kind: input, shape index: {}]
  %s1 = inlined_call_operand.hbm [shape: bf16[2,8,32], index: 1, kind: input, shape index: {}]
  %s2 = inlined_call_operand.hbm [shape: bf16[32,32], index: 2, kind: input, shape index: {}]
  %s3 = inlined_call_operand.vmem [shape: f32[1,32], index: 3, kind: input, shape index: {}]
  %s4 = inlined_call_operand.hbm [shape: bf16[32,128], index: 4, kind: input, shape index: {}]
  %s5 = inlined_call_operand.vmem [shape: f32[1,128], index: 5, kind: input, shape index: {}]
  %s6 = inlined_call_operand.hbm [shape: f32[2,8,128], index: 6, kind: output, shape index: {}]
  %s7 = sld [smem:[#allocation0]]
  $region65: #{tpu_custom_call.1} parent=0
    _
  %s9 = ssub.s32 1, %s7
  %s10 = scalar_select 0, %s9, %s7
  %s12 = sshll.u32 %s0, 4
  %s13 = int_to_ptr.hbm [resolvable:$true] %s12
  %15 = dma.hbm_to_smem %s13, 16, [#allocation3], [#allocation2]
  %17 = dma.done [#allocation2], 16
  %18 = sfence
  $region1: #{tpu_custom_call.1} parent=0
    #allocation4 [shape = 'u8[4096]{0}', space=vmem, size = 0x1000, scoped, tag = 'input window, operand 1']
    #allocation5 [shape = 's32[2]{0}', space=sflag, size = 0x8, scoped, tag = 'scoped memory for tpu_custom_call.1']
    #allocation6 [shape = 's32[2]{0}', space=sflag, size = 0x8, scoped, tag = 'scoped memory for tpu_custom_call.1']
    #allocation7 [shape = 'u8[8192]{0}', space=vmem, size = 0x2000, scoped, tag = 'input window, operand 2, single buffered']
    #allocation8 [shape = 's32[1]{0}', space=sflag, size = 0x4, scoped, tag = 'scoped memory for tpu_custom_call.1']
    #allocation9 [shape = 'u8[8192]{0}', space=vmem, size = 0x2000, scoped, tag = 'input window, operand 4, single buffered']
    #allocation10 [shape = 'u8[8192]{0}', space=vmem, size = 0x2000, scoped, tag = 'output window, operand 0']
    %19 = vsyncpa [#allocation5], 0
    %s20 = scalar_lea.sflag [#allocation5], 1
    %21 = vsyncpa %s20, 0
    %22 = vsyncpa [#allocation8], 0
    %23 = vsyncpa [#allocation6], 0
    %s24 = scalar_lea.sflag [#allocation6], 1
    %25 = vsyncpa %s24, 0
    loop: start=0, step=1, limit=4
    $region2: #{tpu_custom_call.1} parent=1 // loop_pre_header
      _
    $region3: #{tpu_custom_call.1} parent=1 // loop_header
      %s27 = sphi 0, %s31
      %p28 = scmp.ge.s32.totalorder %s27, 4
      %s34 = sphi 0, %s46
      %s35 = sphi 0, %s42
      %s36 = sphi 0, %s34
      %s37 = sphi 0, %s35
      %s38 = sphi 0, %s36
      %s39 = sphi 0, %s37
      %s51 = sphi 0, %s53
      %s54 = sphi 0, %s51
      %s55 = sphi 0, %s54
      %s71 = sphi 0, %s55
      %s75 = sphi 0, %s75
      %s77 = sphi 0, %s75
      %s78 = sphi 0, %s77
      %s92 = sphi 0, %s78
      %s96 = sphi 0, %s96
      %s98 = sphi 0, %s96
      %s99 = sphi 0, %s98
      %s113 = sphi 0, %s99
      %s117 = sphi 0, %s117
      %s119 = sphi 0, %s117
      %s120 = sphi 0, %s119
      %s134 = sphi 0, %s120
      %s138 = sphi 0, %s138
      %s140 = sphi 0, %s138
      %s141 = sphi 0, %s140
      %s155 = sphi 0, %s141
      %s163 = sphi 0, %s165
      %s166 = sphi 0, %s163
      %s167 = sphi 0, %s166
      %s183 = sphi 0, %s167
    $region4: #{tpu_custom_call.1} parent=1 // loop_header_branch
      %30 = sbr.rel (%p28) target = $region8
    $region5: #{tpu_custom_call.1} parent=1 // loop_body
      %s32 = ssub.s32 %s27, 1
      %s33 = ssub.s32 %s27, 2
      %s40 = sadd.s32 1, %s35
      %p41 = scmp.ge.s32.totalorder %s40, 1
      %s42 = scalar_select %p41, 0, %s40
      %s43 = sadd.s32 1, %s34
      %s44 = scalar_select %p41, %s43, %s34
      %p45 = scmp.ge.s32.totalorder %s44, 2
      %s46 = scalar_select %p45, 0, %s44
      %s47 = ssub.s32 %s34, %s46
      %s48 = ssub.s32 %s35, %s42
      %s49 = sor.u32 %s47, %s48
      %p50 = scmp.eq.s32.totalorder %s49, 0
      %s52 = sadd.s32 %s51, 1
      %s53 = scalar_select %p50, %s51, %s52
      %p56 = pneg %p50
      %p57 = scmp.eq.s32.totalorder %s27, 1
      %p58 = por %p56, %p57
      %p59 = scmp.ne.s32.totalorder %s51, %s54
      %p60 = scmp.eq.s32.totalorder %s27, 0
      %p61 = por %p59, %p60
      %p62 = scmp.ne.s32.totalorder %s51, %s54
      %p63 = scmp.eq.s32.totalorder %s32, 1
      %p64 = por %p62, %p63
      %p65 = scmp.ne.s32.totalorder %s54, %s55
      %p66 = scmp.eq.s32.totalorder %s32, 0
      %p67 = por %p65, %p66
      %p68 = scmp.ne.s32.totalorder %s54, %s55
      %p69 = scmp.eq.s32.totalorder %s33, 1
      %p70 = por %p68, %p69
      %p72 = scmp.ne.s32.totalorder %s55, %s71
      %p73 = scmp.eq.s32.totalorder %s33, 0
      %p74 = por %p72, %p73
      %s76 = sadd.s32 %s75, 1
      %p79 = scmp.eq.s32.totalorder %s27, 1
      %p80 = scmp.ne.s32.totalorder %s75, %s77
      %p81 = scmp.eq.s32.totalorder %s27, 0
      %p82 = por %p80, %p81
      %p83 = scmp.ne.s32.totalorder %s75, %s77
      %p84 = scmp.eq.s32.totalorder %s32, 1
      %p85 = por %p83, %p84
      %p86 = scmp.ne.s32.totalorder %s77, %s78
      %p87 = scmp.eq.s32.totalorder %s32, 0
      %p88 = por %p86, %p87
      %p89 = scmp.ne.s32.totalorder %s77, %s78
      %p90 = scmp.eq.s32.totalorder %s33, 1
      %p91 = por %p89, %p90
      %p93 = scmp.ne.s32.totalorder %s78, %s92
      %p94 = scmp.eq.s32.totalorder %s33, 0
      %p95 = por %p93, %p94
      %s97 = sadd.s32 %s96, 1
      %p100 = scmp.eq.s32.totalorder %s27, 1
      %p101 = scmp.ne.s32.totalorder %s96, %s98
      %p102 = scmp.eq.s32.totalorder %s27, 0
      %p103 = por %p101, %p102
      %p104 = scmp.ne.s32.totalorder %s96, %s98
      %p105 = scmp.eq.s32.totalorder %s32, 1
      %p106 = por %p104, %p105
      %p107 = scmp.ne.s32.totalorder %s98, %s99
      %p108 = scmp.eq.s32.totalorder %s32, 0
      %p109 = por %p107, %p108
      %p110 = scmp.ne.s32.totalorder %s98, %s99
      %p111 = scmp.eq.s32.totalorder %s33, 1
      %p112 = por %p110, %p111
      %p114 = scmp.ne.s32.totalorder %s99, %s113
      %p115 = scmp.eq.s32.totalorder %s33, 0
      %p116 = por %p114, %p115
      %s118 = sadd.s32 %s117, 1
      %p121 = scmp.eq.s32.totalorder %s27, 1
      %p122 = scmp.ne.s32.totalorder %s117, %s119
      %p123 = scmp.eq.s32.totalorder %s27, 0
      %p124 = por %p122, %p123
      %p125 = scmp.ne.s32.totalorder %s117, %s119
      %p126 = scmp.eq.s32.totalorder %s32, 1
      %p127 = por %p125, %p126
      %p128 = scmp.ne.s32.totalorder %s119, %s120
      %p129 = scmp.eq.s32.totalorder %s32, 0
      %p130 = por %p128, %p129
      %p131 = scmp.ne.s32.totalorder %s119, %s120
      %p132 = scmp.eq.s32.totalorder %s33, 1
      %p133 = por %p131, %p132
      %p135 = scmp.ne.s32.totalorder %s120, %s134
      %p136 = scmp.eq.s32.totalorder %s33, 0
      %p137 = por %p135, %p136
      %s139 = sadd.s32 %s138, 1
      %p142 = scmp.eq.s32.totalorder %s27, 1
      %p143 = scmp.ne.s32.totalorder %s138, %s140
      %p144 = scmp.eq.s32.totalorder %s27, 0
      %p145 = por %p143, %p144
      %p146 = scmp.ne.s32.totalorder %s138, %s140
      %p147 = scmp.eq.s32.totalorder %s32, 1
      %p148 = por %p146, %p147
      %p149 = scmp.ne.s32.totalorder %s140, %s141
      %p150 = scmp.eq.s32.totalorder %s32, 0
      %p151 = por %p149, %p150
      %p152 = scmp.ne.s32.totalorder %s140, %s141
      %p153 = scmp.eq.s32.totalorder %s33, 1
      %p154 = por %p152, %p153
      %p156 = scmp.ne.s32.totalorder %s141, %s155
      %p157 = scmp.eq.s32.totalorder %s33, 0
      %p158 = por %p156, %p157
      %s159 = ssub.s32 %s34, %s46
      %s160 = ssub.s32 %s35, %s42
      %s161 = sor.u32 %s159, %s160
      %p162 = scmp.eq.s32.totalorder %s161, 0
      %s164 = sadd.s32 %s163, 1
      %s165 = scalar_select %p162, %s163, %s164
      %p168 = pneg %p162
      %p169 = scmp.eq.s32.totalorder %s27, 1
      %p170 = por %p168, %p169
      %p171 = scmp.ne.s32.totalorder %s163, %s166
      %p172 = scmp.eq.s32.totalorder %s27, 0
      %p173 = por %p171, %p172
      %p174 = scmp.ne.s32.totalorder %s163, %s166
      %p175 = scmp.eq.s32.totalorder %s32, 1
      %p176 = por %p174, %p175
      %p177 = scmp.ne.s32.totalorder %s166, %s167
      %p178 = scmp.eq.s32.totalorder %s32, 0
      %p179 = por %p177, %p178
      %p180 = scmp.ne.s32.totalorder %s166, %s167
      %p181 = scmp.eq.s32.totalorder %s33, 1
      %p182 = por %p180, %p181
      %p184 = scmp.ne.s32.totalorder %s167, %s183
      %p185 = scmp.eq.s32.totalorder %s33, 0
      %p186 = por %p184, %p185
      %p187 = scmp.le.s32.totalorder 1, %s27
      %p188 = scmp.lt.s32.totalorder %s27, 3
      %p189 = pnand %p187, %p188
      %p190 = pneg %p189
      // Predicated region
      $region9: #{tpu_custom_call.1} parent=5 // pred_check
        _
      $region10: #{tpu_custom_call.1} parent=5 // pred_check_branch
        %192 = sbr.rel (%p189) target = $region12
      $region11: #{tpu_custom_call.1} parent=5 // pred_region
        %s193 = ssub.s32 %s27, 1
        // Predicated region
        $region13: #{tpu_custom_call.1} parent=11 // pred_check
          %p194 = pneg %p88
        $region14: #{tpu_custom_call.1} parent=11 // pred_check_branch
          %196 = sbr.rel (%p194) target = $region16
        $region15: #{tpu_custom_call.1} parent=11 // pred_region
          %198 = vsyncadd [#allocation8], 0
          %s199 = sshll.u32 %s2, 4
          %s200 = int_to_ptr.hbm [resolvable:$true] %s199
          %s201 = sshll.u32 [#allocation7], 4
          %s202 = int_to_ptr.vmem [resolvable:$true] %s201
          %207 = dma.hbm_to_vmem [thread:$0]  %s200, 256, %s202, [#allocation8], 64, 64, 4
        $region16: #{tpu_custom_call.1} parent=11 // pred_fallthru
          _
        // Predicated region
        $region17: #{tpu_custom_call.1} parent=11 // pred_check
          %p208 = pneg %p109
        $region18: #{tpu_custom_call.1} parent=11 // pred_check_branch
          %210 = sbr.rel (%p208) target = $region20
        $region19: #{tpu_custom_call.1} parent=11 // pred_region
          _
        $region20: #{tpu_custom_call.1} parent=11 // pred_fallthru
          _
        // Predicated region
        $region21: #{tpu_custom_call.1} parent=11 // pred_check
          %p211 = pneg %p130
        $region22: #{tpu_custom_call.1} parent=11 // pred_check_branch
          %213 = sbr.rel (%p211) target = $region24
        $region23: #{tpu_custom_call.1} parent=11 // pred_region
          %215 = vsyncadd [#allocation8], 0
          %s216 = sshll.u32 %s4, 4
          %s217 = int_to_ptr.hbm [resolvable:$true] %s216
          %s218 = sshll.u32 [#allocation9], 4
          %s219 = int_to_ptr.vmem [resolvable:$true] %s218
          %224 = dma.hbm_to_vmem [thread:$0]  %s217, 256, %s219, [#allocation8], 64, 64, 4
        $region24: #{tpu_custom_call.1} parent=11 // pred_fallthru
          _
        // Predicated region
        $region25: #{tpu_custom_call.1} parent=11 // pred_check
          %p225 = pneg %p151
        $region26: #{tpu_custom_call.1} parent=11 // pred_check_branch
          %227 = sbr.rel (%p225) target = $region28
        $region27: #{tpu_custom_call.1} parent=11 // pred_region
          _
        $region28: #{tpu_custom_call.1} parent=11 // pred_fallthru
          _
      $region12: #{tpu_custom_call.1} parent=5 // pred_fallthru
        _
      %p228 = scmp.lt.s32.totalorder %s27, 2
      // Predicated region
      $region29: #{tpu_custom_call.1} parent=5 // pred_check
        %p229 = pneg %p228
      $region30: #{tpu_custom_call.1} parent=5 // pred_check_branch
        %231 = sbr.rel (%p229) target = $region32
      $region31: #{tpu_custom_call.1} parent=5 // pred_region
        // Predicated region
        $region33: #{tpu_custom_call.1} parent=31 // pred_check
          %p232 = pneg %p61
        $region34: #{tpu_custom_call.1} parent=31 // pred_check_branch
          %234 = sbr.rel (%p232) target = $region36
        $region35: #{tpu_custom_call.1} parent=31 // pred_region
          %s235 = sand.u32 %s51, 1
          %s236 = scalar_lea.sflag [#allocation5], %s235
          %s237 = sand.u32 %s51, 1
          %s238 = smul.addr %s237, 4
          %s239 = scalar_lea.vmem [#allocation4], %s238
          %241 = vsyncadd %s236, 0
          %s242 = sadd.s32 %s35, %s34
          %s243 = smul.addr %s242, 4
          %s244 = scalar_lea.hbm %s1, %s243
          %s246 = sshll.u32 %s244, 4
          %s247 = int_to_ptr.hbm [resolvable:$true] %s246
          %s248 = sshll.u32 %s239, 4
          %s249 = int_to_ptr.vmem [resolvable:$true] %s248
          %251 = dma.hbm_to_vmem [thread:$0]  %s247, 64, %s249, %s236
        $region36: #{tpu_custom_call.1} parent=31 // pred_fallthru
          _
      $region32: #{tpu_custom_call.1} parent=5 // pred_fallthru
        _
      %p252 = scmp.le.s32.totalorder 1, %s27
      %p253 = scmp.lt.s32.totalorder %s27, 3
      %p254 = pnand %p252, %p253
      %p255 = pneg %p254
      // Predicated region
      $region37: #{tpu_custom_call.1} parent=5 // pred_check
        _
      $region38: #{tpu_custom_call.1} parent=5 // pred_check_branch
        %257 = sbr.rel (%p254) target = $region40
      $region39: #{tpu_custom_call.1} parent=5 // pred_region
        %s258 = ssub.s32 %s27, 1
        %s259 = sand.u32 %s54, 1
        %s260 = scalar_lea.sflag [#allocation5], %s259
        %s261 = sand.u32 %s54, 1
        %s262 = smul.addr %s261, 4
        %s263 = scalar_lea.vmem [#allocation4], %s262
        // Predicated region
        $region41: #{tpu_custom_call.1} parent=39 // pred_check
          %p264 = pneg %p67
        $region42: #{tpu_custom_call.1} parent=39 // pred_check_branch
          %266 = sbr.rel (%p264) target = $region44
        $region43: #{tpu_custom_call.1} parent=39 // pred_region
          %268 = dma.done %s260, 64
        $region44: #{tpu_custom_call.1} parent=39 // pred_fallthru
          _
        // Predicated region
        $region45: #{tpu_custom_call.1} parent=39 // pred_check
          %p269 = pneg %p88
        $region46: #{tpu_custom_call.1} parent=39 // pred_check_branch
          %271 = sbr.rel (%p269) target = $region48
        $region47: #{tpu_custom_call.1} parent=39 // pred_region
          %273 = dma.done [#allocation8], 256
        $region48: #{tpu_custom_call.1} parent=39 // pred_fallthru
          _
        // Predicated region
        $region49: #{tpu_custom_call.1} parent=39 // pred_check
          %p274 = pneg %p130
        $region50: #{tpu_custom_call.1} parent=39 // pred_check_branch
          %276 = sbr.rel (%p274) target = $region52
        $region51: #{tpu_custom_call.1} parent=39 // pred_region
          %278 = dma.done [#allocation8], 256
        $region52: #{tpu_custom_call.1} parent=39 // pred_fallthru
          _
        %s279 = sand.u32 %s54, 1
        %s280 = scalar_lea.sflag [#allocation5], %s279
        %s281 = sand.u32 %s54, 1
        %s282 = smul.addr %s281, 4
        %s283 = scalar_lea.vmem [#allocation4], %s282
        %p284 = pneg %p67
        %p285 = pneg %p64
        %p286 = pneg %p88
        %p287 = pneg %p85
        %p288 = pneg %p109
        %p289 = pneg %p106
        %p290 = pneg %p130
        %p291 = pneg %p127
        %p292 = pneg %p151
        %p293 = pneg %p148
        %p294 = pneg %p179
        %p295 = pneg %p176
        %s296 = sand.u32 %s166, 1
        %s297 = scalar_lea.sflag [#allocation6], %s296
        %s298 = sand.u32 %s166, 1
        %s299 = smul.addr %s298, 8
        %s300 = scalar_lea.vmem [#allocation10], %s299
        %s302 = sld [smem:[#allocation3 + %s36]]
        %s303 = smul.u32 %s37, 8
        %v304 = vlaneseq
        %v305 = vshrl.u32 %v304, 7
        %v306 = vstv %s303
        %v307 = vadd.s32 %v306, %v305
        %v308 = vstv %s302
        %vm309 = vcmp.lt.s32.totalorder %v307, %v308
        %v310 = vld [vmem:[%s263] sm:$0xf]
        %v311 = vld [vmem:[#allocation7] sm:$0xf]
        %v312 = vld [vmem:[#allocation7 + $0x4] sm:$0xf]
        %v313 = vld [vmem:[#allocation7 + $0x8] sm:$0xf]
        %v314 = vld [vmem:[#allocation7 + $0xc] sm:$0xf]
        %v315 = vld [vmem:[%s3] sm:$0x1]
        %v317 = vperm.slane %v315, 0
        %v323 = vunpack.c.l.b16 %v311
        %v324 = vunpack.c.l.b16 %v312
        %v325 = vunpack.c.l.b16 %v313
        %v326 = vunpack.c.l.b16 %v314
        %v327 = vpack.c.b16 %v324, %v323
        %v328 = vpack.c.b16 %v326, %v325
        %vm331 = vcmask 261120
        %v333 = vsel %vm331, %v310, 0
        %335 = vmatpush.bf16.msra.mxu0 0
        %336 = vmatpush.bf16.msra.mxu0 0
        %337 = vmatpush.bf16.msra.mxu0 0
        %338 = vmatpush.bf16.msra.mxu0 0
        %339 = vmatpush.bf16.msra.mxu0 0
        %340 = vmatpush.bf16.msra.mxu0 0
        %341 = vmatpush.bf16.msra.mxu0 %v328
        %342 = vmatpush.bf16.msra.mxu0 %v327
        %343 = vmatmul.bf16.gmra.mxu0 %v333
        %v344 = vpop.f32.mrf.mxu0
        %v345 = vadd.f32 %v317, %v344
        %v346 = vpop.f32.mrf.mxu0
        %347 = vdwg.mxu0
        %v348 = vtanh.pop %v345
        %v349 = vsel %vm309, 1, 0
        %vm350 = vcmp.eq.s32.totalorder %v349, 1
        %v351 = vsel %vm350, %v348, 0.0
        %v352 = vpack.c.bf16 %v351, %v351
        %v353 = vld [vmem:[#allocation9] sm:$0xf]
        %v354 = vld [vmem:[#allocation9 + $0x4] sm:$0xf]
        %v355 = vld [vmem:[#allocation9 + $0x8] sm:$0xf]
        %v356 = vld [vmem:[#allocation9 + $0xc] sm:$0xf]
        %v357 = vld [vmem:[%s5] sm:$0x1]
        %v359 = vperm.slane %v357, 0
        %v365 = vunpack.c.l.b16 %v353
        %v366 = vunpack.c.l.b16 %v354
        %v367 = vunpack.c.l.b16 %v355
        %v368 = vunpack.c.l.b16 %v356
        %v369 = vpack.c.b16 %v366, %v365
        %v370 = vpack.c.b16 %v368, %v367
        %v374 = vsel %vm331, %v352, 0
        %376 = vmatpush.bf16.msra.mxu0 0
        %377 = vmatpush.bf16.msra.mxu0 0
        %378 = vmatpush.bf16.msra.mxu0 0
        %379 = vmatpush.bf16.msra.mxu0 0
        %380 = vmatpush.bf16.msra.mxu0 0
        %381 = vmatpush.bf16.msra.mxu0 0
        %382 = vmatpush.bf16.msra.mxu0 %v370
        %383 = vmatpush.bf16.msra.mxu0 %v369
        %384 = vmatmul.bf16.gmra.mxu0 %v374
        %v385 = vpop.f32.mrf.mxu0
        %v386 = vadd.f32 %v359, %v385
        %v387 = vpop.f32.mrf.mxu0
        %388 = vdwg.mxu0
        %389 = vst [vmem:[%s300] sm:$0xff] %v386
        %s390 = sand.u32 %s166, 1
        %s391 = scalar_lea.sflag [#allocation6], %s390
        %s392 = sand.u32 %s166, 1
        %s393 = smul.addr %s392, 8
        %s394 = scalar_lea.vmem [#allocation10], %s393
        // Predicated region
        $region53: #{tpu_custom_call.1} parent=39 // pred_check
          %p395 = pneg %p176
        $region54: #{tpu_custom_call.1} parent=39 // pred_check_branch
          %397 = sbr.rel (%p395) target = $region56
        $region55: #{tpu_custom_call.1} parent=39 // pred_region
          %399 = vsyncadd %s391, 0
          %s400 = sadd.s32 %s37, %s36
          %s401 = smul.addr %s400, 8
          %s402 = scalar_lea.hbm %s6, %s401
          %s404 = sshll.u32 %s394, 4
          %s405 = int_to_ptr.vmem [resolvable:$true] %s404
          %s406 = sshll.u32 %s402, 4
          %s407 = int_to_ptr.hbm [resolvable:$true] %s406
          %409 = dma.vmem_to_hbm [thread:$0]  %s405, 128, %s407, %s391
        $region56: #{tpu_custom_call.1} parent=39 // pred_fallthru
          _
      $region40: #{tpu_custom_call.1} parent=5 // pred_fallthru
        _
      %p410 = scmp.le.s32.totalorder 2, %s27
      // Predicated region
      $region57: #{tpu_custom_call.1} parent=5 // pred_check
        %p411 = pneg %p410
      $region58: #{tpu_custom_call.1} parent=5 // pred_check_branch
        %413 = sbr.rel (%p411) target = $region60
      $region59: #{tpu_custom_call.1} parent=5 // pred_region
        %s414 = ssub.s32 %s27, 2
        // Predicated region
        $region61: #{tpu_custom_call.1} parent=59 // pred_check
          %p415 = pneg %p182
        $region62: #{tpu_custom_call.1} parent=59 // pred_check_branch
          %417 = sbr.rel (%p415) target = $region64
        $region63: #{tpu_custom_call.1} parent=59 // pred_region
          %s418 = sand.u32 %s167, 1
          %s419 = scalar_lea.sflag [#allocation6], %s418
          %s420 = sand.u32 %s167, 1
          %s421 = smul.addr %s420, 8
          %s422 = scalar_lea.vmem [#allocation10], %s421
          %424 = dma.done %s419, 128
        $region64: #{tpu_custom_call.1} parent=59 // pred_fallthru
          _
      $region60: #{tpu_custom_call.1} parent=5 // pred_fallthru
        _
    $region6: #{tpu_custom_call.1} parent=1 // loop_footer
      %s31 = sadd.s32 1, %s27
    $region7: #{tpu_custom_call.1} parent=1 // loop_footer_branch
      %26 = sbr.rel target = $region3
    $region8: #{tpu_custom_call.1} parent=1 // loop_exit
      _
    %425 = vsyncpa [#allocation5], 1
    %s426 = scalar_lea.sflag [#allocation5], 1
    %427 = vsyncpa %s426, 1
    %428 = vsyncpa [#allocation8], 1
    %429 = vsyncpa [#allocation6], 1
    %s430 = scalar_lea.sflag [#allocation6], 1
    %431 = vsyncpa %s430, 1

</llo_original>
